<compile_context>
chip_gen: v6e
topology: v6e:2x2x1
jax: 0.10.0
libtpu: 0.0.40
codegen_flags: <defaults>
</compile_context>

<pallas_src>
import jax
import jax.numpy as jnp
from jax.experimental import pallas as pl
from jax.experimental.pallas import tpu as pltpu


def _snake_kernel(x_ref, p_ref, o_ref):
    # x_ref block: (Rt, Tt); p_ref block: (2, Rt, 1) float32.
    x = x_ref[...].astype(jnp.float32)       # single upcast (covers bf16 inputs)
    a = p_ref[0]                              # (Rt, 1): alpha, broadcast over lanes
    inv_a = p_ref[1]                          # (Rt, 1): 1/(alpha+eps)
    s = jnp.sin(x * a)
    o_ref[...] = (x + inv_a * (s * s)).astype(o_ref.dtype)


def _pick_tiles(R, T, itemsize, target_bytes):
    """Choose (r_tile, t_tile) for the flattened (R=B*C, T) array.

    Valid TPU blocks: sublane tile a multiple of 8 (16 for packed dtypes) or
    the full R; lane tile a multiple of 128 or the full T. Prefer full-T rows
    (maximally contiguous DMA) whenever they fit the per-block budget.
    """
    row_unit = 16 if itemsize < 4 else 8
    target_elems = max(1, target_bytes // itemsize)
    min_rows = min(R, row_unit)

    if min_rows * T <= target_elems:
        # Full-length rows fit: take full T and as many row-unit rows as fit.
        t_tile = T
        r_tile = max(min_rows, ((target_elems // T) // row_unit) * row_unit)
        r_tile = min(r_tile, R)
    else:
        # One row-unit of rows, time tile as wide as the budget allows.
        r_tile = min_rows
        t_tile = max(128, ((target_elems // min_rows) // 128) * 128)
        t_tile = min(t_tile, T)
    return r_tile, t_tile


def _scoped_vmem_limit(needed_bytes):
    """Raise the scoped-VMEM limit enough for the pipeline, capped below physical."""
    phys = 64 * 1024 * 1024  # conservative fallback (v7x per-TC VMEM)
    try:
        info = pltpu.get_tpu_info()
        phys = int(getattr(info, "vmem_capacity_bytes", phys)) or phys
    except Exception:
        pass
    cap = (phys * 3) // 4                      # leave headroom for compiler scratch
    limit = max(needed_bytes + (8 << 20), 32 << 20)
    return int(min(cap, limit))


def snake(x, alpha, *, alpha_logscale=False, no_div_by_zero=1e-9,
          target_block_bytes=4 * 1024 * 1024):
    """x: (B, C, T) float array; alpha: (C,) per-channel parameter (f32 math)."""
    B, C, T = x.shape
    R = B * C
    itemsize = jnp.dtype(x.dtype).itemsize

    # Hoist exp(alpha) and the reciprocal out of the kernel; keep them f32
    # regardless of x dtype (matches the f32 PyTorch parameter). Pack alpha and
    # 1/(alpha+eps) into one (2, R, 1) array, repeated per batch row.
    a = alpha.astype(jnp.float32)
    if alpha_logscale:
        a = jnp.exp(a)
    a_rows = jnp.tile(a, B)                                      # (R,)
    inv_rows = 1.0 / (a_rows + jnp.float32(no_div_by_zero))      # (R,)
    params = jnp.stack([a_rows, inv_rows]).reshape(2, R, 1)      # (2, R, 1) f32

    x2 = x.reshape(R, T)

    r_tile, t_tile = _pick_tiles(R, T, itemsize, target_block_bytes)
    nr = pl.cdiv(R, r_tile)
    nt = pl.cdiv(T, t_tile)

    # Put the larger axis first so megacore sharding of the leading grid dim
    # keeps both TensorCores busy even at batch=1 (both axes are parallel).
    if nt >= nr:
        grid = (nt, nr)
        x_map = lambda ti, ri: (ri, ti)
        p_map = lambda ti, ri: (0, ri, 0)
    else:
        grid = (nr, nt)
        x_map = lambda ri, ti: (ri, ti)
        p_map = lambda ri, ti: (0, ri, 0)

    block_bytes = r_tile * t_tile * itemsize
    # Double-buffered input + output blocks, plus the tiny packed params.
    needed_vmem = 4 * block_bytes + 4 * (2 * R * 4) + (1 << 20)
    vmem_limit = _scoped_vmem_limit(needed_vmem)

    n_elems = R * T
    cost = pl.CostEstimate(
        flops=4 * n_elems,
        transcendentals=n_elems,
        bytes_accessed=2 * n_elems * itemsize + 2 * R * 4,
    )

    out2 = pl.pallas_call(
        _snake_kernel,
        out_shape=jax.ShapeDtypeStruct((R, T), x.dtype),
        grid_spec=pltpu.PrefetchScalarGridSpec(
            num_scalar_prefetch=0,
            grid=grid,
            in_specs=[
                pl.BlockSpec((r_tile, t_tile), x_map),
                pl.BlockSpec((2, r_tile, 1), p_map),
            ],
            out_specs=pl.BlockSpec((r_tile, t_tile), x_map),
        ),
        compiler_params=pltpu.CompilerParams(
            dimension_semantics=("parallel", "parallel"),
            vmem_limit_bytes=vmem_limit,
        ),
        cost_estimate=cost,
    )(x2, params)
    return out2.reshape(B, C, T)


def snake_reference(x, alpha, *, alpha_logscale=False, no_div_by_zero=1e-9):
    a = alpha.astype(jnp.float32)[None, :, None]
    if alpha_logscale:
        a = jnp.exp(a)
    xf = x.astype(jnp.float32)
    y = xf + (1.0 / (a + no_div_by_zero)) * jnp.sin(xf * a) ** 2
    return y.astype(x.dtype)


if __name__ == "__main__":
    key = jax.random.PRNGKey(0)
    k1, k2, k3, k4 = jax.random.split(key, 4)

    # Small shape matching the module layout (B, C, T); alpha from module init.
    B, C, T = 2, 4, 16
    x = jax.random.normal(k1, (B, C, T), dtype=jnp.float32)
    alpha = jnp.ones((C,), dtype=jnp.float32)
    out = jax.block_until_ready(snake(x, alpha))
    ref = snake_reference(x, alpha)
    assert out.shape == x.shape and out.dtype == x.dtype
    assert jnp.allclose(out, ref, atol=1e-5, rtol=1e-5)

    # Exercise the tiled path (multi-step grid, T remainder block, logscale
    # alpha) by shrinking the per-block budget; the data itself stays tiny.
    B2, C2, T2 = 2, 24, 2200
    x2 = jax.random.normal(k2, (B2, C2, T2), dtype=jnp.float32)
    alpha2 = 0.1 * jax.random.normal(k3, (C2,), dtype=jnp.float32)
    out2 = jax.block_until_ready(
        snake(x2, alpha2, alpha_logscale=True, target_block_bytes=64 * 1024))
    ref2 = snake_reference(x2, alpha2, alpha_logscale=True)
    assert out2.shape == x2.shape and out2.dtype == x2.dtype
    assert jnp.allclose(out2, ref2, atol=1e-5, rtol=1e-5)

    # bf16 input path (16-sublane row unit, f32 compute, cast back to bf16).
    B3, C3, T3 = 1, 8, 256
    x3 = jax.random.normal(k4, (B3, C3, T3), dtype=jnp.bfloat16)
    alpha3 = jnp.ones((C3,), dtype=jnp.float32)
    out3 = jax.block_until_ready(snake(x3, alpha3))
    ref3 = snake_reference(x3, alpha3)
    assert out3.shape == x3.shape and out3.dtype == x3.dtype
    assert jnp.allclose(out3.astype(jnp.float32), ref3.astype(jnp.float32),
                        atol=2e-2, rtol=2e-2)

    print("KERNEL_OK")
</pallas_src>

<mosaic_0001>
module attributes {stable_mosaic.version = 11 : i64} {
  func.func @_snake_kernel(%arg0: i32, %arg1: i32, %arg2: memref<8x16xf32, #tpu.memory_space<vmem>>, %arg3: memref<2x8x1xf32, #tpu.memory_space<vmem>>, %arg4: memref<8x16xf32, #tpu.memory_space<vmem>>) attributes {dimension_semantics = [#tpu.dimension_semantics<parallel>, #tpu.dimension_semantics<parallel>], iteration_bounds = array<i64: 1, 1>, scalar_prefetch = 0 : i64, scratch_operands = 0 : i64, tpu.core_type = #tpu.core_type<tc>, window_params = [{transform_indices = @transform_0, window_bounds = array<i64: 8, 16>}, {transform_indices = @transform_1, window_bounds = array<i64: 2, 8, 1>}, {transform_indices = @transform_2, window_bounds = array<i64: 8, 16>}]} {
    %c0 = arith.constant 0 : index
    %c0_0 = arith.constant 0 : index
    %0 = vector.load %arg2[%c0, %c0_0] : memref<8x16xf32, #tpu.memory_space<vmem>>, vector<8x16xf32>
    %c0_1 = arith.constant 0 : index
    %c0_2 = arith.constant 0 : index
    %c0_3 = arith.constant 0 : index
    %1 = vector.load %arg3[%c0_1, %c0_2, %c0_3] : memref<2x8x1xf32, #tpu.memory_space<vmem>>, vector<1x8x1xf32>
    %2 = vector.shape_cast %1 : vector<1x8x1xf32> to vector<8x1xf32>
    %c1 = arith.constant 1 : index
    %c0_4 = arith.constant 0 : index
    %c0_5 = arith.constant 0 : index
    %3 = vector.load %arg3[%c1, %c0_4, %c0_5] : memref<2x8x1xf32, #tpu.memory_space<vmem>>, vector<1x8x1xf32>
    %4 = vector.shape_cast %3 : vector<1x8x1xf32> to vector<8x1xf32>
    %5 = vector.broadcast %2 : vector<8x1xf32> to vector<8x16xf32>
    %6 = arith.mulf %0, %5 : vector<8x16xf32>
    %7 = math.sin %6 : vector<8x16xf32>
    %8 = arith.mulf %7, %7 : vector<8x16xf32>
    %9 = vector.broadcast %4 : vector<8x1xf32> to vector<8x16xf32>
    %10 = arith.mulf %9, %8 : vector<8x16xf32>
    %11 = arith.addf %0, %10 : vector<8x16xf32>
    %c0_6 = arith.constant 0 : index
    %c0_7 = arith.constant 0 : index
    %12 = vector.load %arg4[%c0_6, %c0_7] : memref<8x16xf32, #tpu.memory_space<vmem>>, vector<8x16xf32>
    tpu.vector_store %arg4[%c0_6, %c0_7], %11 {strides = array<i32>} : memref<8x16xf32, #tpu.memory_space<vmem>>, vector<8x16xf32>,
    return
  }
  func.func @transform_0(%arg0: i32, %arg1: i32) -> (i32, i32) {
    %c0_i32 = arith.constant 0 : i32
    return %arg1, %arg0 : i32, i32
  }
  func.func @transform_1(%arg0: i32, %arg1: i32) -> (i32, i32, i32) {
    %c0_i32 = arith.constant 0 : i32
    %c0_i32_0 = arith.constant 0 : i32
    %c0_i32_1 = arith.constant 0 : i32
    return %c0_i32, %arg1, %c0_i32_0 : i32, i32, i32
  }
  func.func @transform_2(%arg0: i32, %arg1: i32) -> (i32, i32) {
    %c0_i32 = arith.constant 0 : i32
    return %arg1, %arg0 : i32, i32
  }
}

</mosaic_0001>

<llo_original>
// kernel: tpu_custom_call.1
$region0: #{tpu_custom_call.1}
  #allocation0 [shape = 'u32[]', space=smem, size = 0x4, offset = 0x4, fixed_abs, tag = 'smem constant byte address 0x4 - core index']
  #allocation1 [shape = 'u32[144,128]{1,0:T(1,128)}', space=vmem, size = 0x12000, scoped, tag = 'internal scratch']
  %s0 = inlined_call_operand.vmem [shape: f32[8,16], index: 0, kind: input, shape index: {}]
  %s1 = inlined_call_operand.vmem [shape: f32[2,8,1], index: 1, kind: input, shape index: {}]
  %s2 = inlined_call_operand.hbm [shape: f32[8,16], index: 2, kind: output, shape index: {}]
  %s3 = sld [smem:[#allocation0]]
  $region18: #{tpu_custom_call.1} parent=0
    _
  %s5 = ssub.s32 1, %s3
  %s6 = scalar_select 0, %s5, %s3
  $region1: #{tpu_custom_call.1} parent=0
    #allocation2 [shape = 'u8[4096]{0}', space=vmem, size = 0x1000, scoped, tag = 'output window, operand 0, single buffered']
    #allocation3 [shape = 's32[1]{0}', space=sflag, size = 0x4, scoped, tag = 'scoped memory for tpu_custom_call.1']
    %7 = vsyncpa [#allocation3], 0
    // Predicated region
    $region2: #{tpu_custom_call.1} parent=1 // pred_check
      _
    $region3: #{tpu_custom_call.1} parent=1 // pred_check_branch
      %9 = sbr.rel (0) target = $region5
    $region4: #{tpu_custom_call.1} parent=1 // pred_region
      _
    $region5: #{tpu_custom_call.1} parent=1 // pred_fallthru
      _
    // Predicated region
    $region6: #{tpu_custom_call.1} parent=1 // pred_check
      _
    $region7: #{tpu_custom_call.1} parent=1 // pred_check_branch
      %11 = sbr.rel (0) target = $region9
    $region8: #{tpu_custom_call.1} parent=1 // pred_region
      _
    $region9: #{tpu_custom_call.1} parent=1 // pred_fallthru
      _
    %v12 = vld [vmem:[%s0] sm:$0xff]
    %v13 = vld [vmem:[%s1] sm:$0xff]
    %s14 = scalar_lea.vmem %s1, 8
    %v15 = vld [vmem:[%s14] sm:$0xff]
    %17 = vset.pattern.permute.xlu0 0
    %18 = vperm.xlu0 %17, %v13
    %v19 = vpop.permute.xlu0 %18
    %v21 = vmul.f32 %v12, %v19
    %v22 = vand.u32 2147483647, %v21
    %vm23 = vcmp.le.f32.partialorder %v22, 0.7853982
    %vm24 = vcmp.lt.s32.totalorder %v21, 0
    %v25 = vand.u32 %v21, 2139095040
    %v26 = vshrl.u32 %v25, 23
    %v27 = vsub.s32 %v26, 127
    %v28 = vand.u32 2147483647, %v21
    %v29 = vand.u32 %v28, 8388607
    %v30 = vor.u32 %v29, 8388608
    %v31 = vsub.s32 0, %v30
    %v32 = vadd.s32 %v27, 1
    %vm33 = vcmp.gt.s32.totalorder %v32, 0
    %v34 = vsel %vm33, %v32, 0
    %v35 = vshrl.u32 %v34, 5
    %v36 = vand.u32 %v34, 31
    %v37 = vsub.s32 32, %v36
    %v38 = vshrl.u32 683565275, %v37
    %v39 = vshll.u32 683565275, %v36
    %v40 = vshrl.u32 2475754826, %v37
    %v41 = vor.u32 %v39, %v40
    %v42 = vshll.u32 2475754826, %v36
    %v43 = vshrl.u32 2131351028, %v37
    %v44 = vor.u32 %v42, %v43
    %v45 = vshll.u32 2131351028, %v36
    %v46 = vshrl.u32 2102212464, %v37
    %v47 = vor.u32 %v45, %v46
    %v48 = vshll.u32 2102212464, %v36
    %v49 = vshrl.u32 920167782, %v37
    %v50 = vor.u32 %v48, %v49
    %v51 = vshll.u32 920167782, %v36
    %v52 = vshrl.u32 1326507024, %v37
    %v53 = vor.u32 %v51, %v52
    %vm54 = vcmp.lt.s32.totalorder %v35, 1
    %vm55 = vcmp.lt.s32.totalorder %v35, 2
    %vm56 = vcmp.lt.s32.totalorder %v35, 3
    %vm57 = vcmp.lt.s32.totalorder %v35, 4
    %v58 = vsel %vm54, %v38, %v41
    %v59 = vsel %vm57, %v47, 2102212464
    %v60 = vsel %vm56, %v44, %v59
    %v61 = vsel %vm55, %v58, %v60
    %v62 = vsel %vm54, %v41, %v44
    %v63 = vsel %vm57, %v50, 920167782
    %v64 = vsel %vm56, %v47, %v63
    %v65 = vsel %vm55, %v62, %v64
    %v66 = vsel %vm54, %v44, %v47
    %v67 = vsel %vm57, %v53, 1326507024
    %v68 = vsel %vm56, %v50, %v67
    %v69 = vsel %vm55, %v66, %v68
    %v70 = vshll.u32 %v30, 8
    %v71 = vmul.u32.u64.compose %v70, %v69
    %v72 = vextract.low.u32 %v71
    %v73 = vextract.high.u32 %v71
    %v74 = vmul.u32.u64.compose %v70, %v65
    %v75 = vextract.low.u32 %v74
    %v76 = vextract.high.u32 %v74
    %v77 = vmul.u32 %v70, %v61
    %v78 = vadd.s32 %v73, %v75
    %vm79 = vc.u32 %v73, %v75
    %v80 = vadd.s32 %v76, 1
    %v81 = vsel %vm79, %v80, %v76
    %v82 = vadd.s32 %v77, %v81
    %v83 = vadd.s32 %v82, 536870912
    %v84 = vshrl.u32 %v83, 30
    %v85 = vshll.u32 %v84, 30
    %v86 = vsub.s32 %v82, %v85
    %vm87 = vcmp.lt.s32.totalorder %v86, 0
    %v88 = vsub.s32 0, %v86
    %v89 = vsel %vm87, %v88, %v86
    %v90 = vclz %v89
    %v91 = vsub.s32 %v90, 2
    %vm92 = vcmp.gt.s32.totalorder 0, %v91
    %v93 = vsel %vm92, 0, %v91
    %v94 = vsub.s32 32, %v93
    %v95 = vshll.u32 %v86, %v93
    %v96 = vshrl.u32 %v78, %v94
    %v97 = vor.u32 %v95, %v96
    %v98 = vsub.s32 4294967266, %v93
    %v99 = vadd.s32 %v98, 127
    %v100 = vshll.u32 %v99, 23
    %v101 = vor.u32 4788187, %v100
    %v102 = vand.u32 2147483647, %v101
    %v104 = vcvt.s32.f32 %v97
    %v105 = vmul.f32 %v104, %v102
    %v106 = vxor.u32 %v105, 2147483648
    %v107 = vsel %vm24, %v106, %v105
    %v108 = vsub.s32 4, %v84
    %v109 = vsel %vm24, %v108, %v84
    %v110 = vsel %vm23, %v21, %v107
    %v111 = vsel %vm23, 0, %v109
    %v112 = vcosq.f32.pop %v110
    %v113 = vsinq.f32.pop %v110
    %vm114 = vweird.f32 %v21
    %v115 = vadd.s32 %v111, 3
    %v116 = vand.u32 %v115, 3
    %vm117 = vcmp.lt.s32.totalorder %v116, 2
    %vm118 = vcmp.eq.s32.totalorder %v116, 0
    %v119 = vxor.u32 %v113, 2147483648
    %v120 = vsel %vm118, %v112, %v119
    %vm121 = vcmp.eq.s32.totalorder %v116, 2
    %v122 = vxor.u32 %v112, 2147483648
    %v123 = vsel %vm121, %v122, %v113
    %v124 = vsel %vm117, %v120, %v123
    %v125 = vsel %vm114, nan, %v124
    %v126 = vmul.f32 %v125, %v125
    %128 = vset.pattern.permute.xlu0 0
    %129 = vperm.xlu0 %128, %v15
    %v130 = vpop.permute.xlu0 %129
    %v132 = vmul.f32 %v130, %v126
    %v133 = vadd.f32 %v12, %v132
    %vm134 = vcmask 130048
    %135 = vst.msk [vmem:[#allocation2] sm:$0xff] %vm134, %v133
    // Predicated region
    $region10: #{tpu_custom_call.1} parent=1 // pred_check
      _
    $region11: #{tpu_custom_call.1} parent=1 // pred_check_branch
      %137 = sbr.rel (0) target = $region13
    $region12: #{tpu_custom_call.1} parent=1 // pred_region
      %s139 = ssub.s32 128, 128
      %140 = vsyncadd [#allocation3], %s139
      %s142 = sshll.u32 [#allocation2], 4
      %s143 = int_to_ptr.vmem [resolvable:$true] %s142
      %145 = dma.vmem_to_hbm [thread:$0]  %s143, 128, %s2, [#allocation3]
    $region13: #{tpu_custom_call.1} parent=1 // pred_fallthru
      _
    // Predicated region
    $region14: #{tpu_custom_call.1} parent=1 // pred_check
      _
    $region15: #{tpu_custom_call.1} parent=1 // pred_check_branch
      %147 = sbr.rel (0) target = $region17
    $region16: #{tpu_custom_call.1} parent=1 // pred_region
      %148 = dma.done [#allocation3], 128
    $region17: #{tpu_custom_call.1} parent=1 // pred_fallthru
      _
    %149 = vsyncpa [#allocation3], 1

</llo_original>
